<compile_context>
chip_gen: v7x
topology: tpu7x:2x2x1
jax: 0.10.0
libtpu: 0.0.40
codegen_flags: <defaults>
</compile_context>

<pallas_src>
import functools

import jax
import jax.numpy as jnp
from jax.experimental import pallas as pl
from jax.experimental.pallas import tpu as pltpu

_LANES = 128
_SUBLANES = 8


def _focal_loss_kernel(x_ref, t_ref, o_ref, *, alpha, gamma, n_valid,
                       first_masked_blk, need_mask):
    i = pl.program_id(1)

    # Zero the resident per-split accumulator block at the start of each split.
    @pl.when(i == 0)
    def _():
        o_ref[...] = jnp.zeros_like(o_ref)

    x = x_ref[...].astype(jnp.float32)
    t = t_ref[...].astype(jnp.float32)

    # Stable BCE-with-logits: max(x,0) - x*t + log1p(exp(-|x|))
    e = jnp.exp(-jnp.abs(x))                       # EUP exp (reused below)
    bce = jnp.maximum(x, 0.0) - x * t + jnp.log1p(e)

    # pt = exp(-bce).  For {0,1} targets this equals sigmoid(x) when t==1 and
    # 1 - sigmoid(x) when t==0; build it from the already-computed `e` instead
    # of issuing a third transcendental.
    inv1pe = 1.0 / (1.0 + e)
    sig = jnp.where(x >= 0.0, inv1pe, e * inv1pe)  # stable sigmoid(x)
    pt = jnp.where(t > 0.5, sig, 1.0 - sig)

    # at = [alpha, 1 - alpha].gather(0, targets)
    at = jnp.where(t > 0.5, 1.0 - alpha, alpha)

    one_m_pt = jnp.maximum(1.0 - pt, 0.0)          # clamp: no pow(neg) NaN risk
    g = float(gamma)
    if g == 2.0:                                   # common case: no pow at all
        mod = one_m_pt * one_m_pt
    elif g == float(int(g)) and 0.0 <= g <= 8.0:   # small integer gamma: unrolled
        mod = jnp.ones_like(one_m_pt)
        for _ in range(int(g)):
            mod = mod * one_m_pt
    else:                                          # general float gamma fallback
        mod = one_m_pt ** jnp.float32(g)

    f_loss = at * mod * bce

    def accum(v):
        # Partial sums as pure VALU vreg adds into the lane-dense (8,128)
        # output accumulator; no cross-lane reduce on the hot path.
        o_ref[...] += v.reshape(-1, _SUBLANES, _LANES).sum(axis=0)

    if need_mask:
        tr = f_loss.shape[0]
        blk = pl.program_id(0) * pl.num_programs(1) + i

        # Fully-valid blocks skip the mask entirely (no iota/compare/select).
        @pl.when(blk < first_masked_blk)
        def _():
            accum(f_loss)

        @pl.when(blk >= first_masked_blk)
        def _():
            ridx = jax.lax.broadcasted_iota(jnp.int32, f_loss.shape, 0) + blk * tr
            cidx = jax.lax.broadcasted_iota(jnp.int32, f_loss.shape, 1)
            accum(jnp.where(ridx * _LANES + cidx < n_valid, f_loss, 0.0))
    else:
        accum(f_loss)


def weighted_focal_loss(inputs, targets, alpha=0.25, gamma=2,
                        rows_per_block=2048, num_splits=2):
    """Pallas TPU weighted focal loss. inputs/targets: same shape, any dtype."""
    x = jnp.asarray(inputs).reshape(-1)
    t = jnp.asarray(targets).reshape(-1)
    n = int(x.shape[0])
    assert n > 0

    # Sublane alignment: 8 for 4-byte dtypes, 16 for 2-byte, 32 for 1-byte.
    pack = max(4 // max(x.dtype.itemsize, 1), 4 // max(t.dtype.itemsize, 1), 1)
    sub = _SUBLANES * pack

    rows_needed = -(-n // _LANES)
    tr = min(int(rows_per_block), ((rows_needed + sub - 1) // sub) * sub)
    tr = max((tr // sub) * sub, sub)
    tiles_per_split = max(-(-rows_needed // (tr * num_splits)), 1)
    rows_total = num_splits * tiles_per_split * tr
    pad = rows_total * _LANES - n
    need_mask = pad > 0
    first_masked_blk = n // (tr * _LANES)          # first block containing padding

    x2 = jnp.pad(x, (0, pad)).reshape(rows_total, _LANES)   # native dtype kept
    t2 = jnp.pad(t, (0, pad)).reshape(rows_total, _LANES)

    kernel = functools.partial(
        _focal_loss_kernel, alpha=float(alpha), gamma=float(gamma),
        n_valid=n, first_masked_blk=first_masked_blk, need_mask=need_mask)

    in_map = lambda c, i: (c * tiles_per_split + i, 0)

    n_total = rows_total * _LANES
    cost = pl.CostEstimate(
        flops=20 * n_total,
        transcendentals=2 * n_total,
        bytes_accessed=int(x2.size * x2.dtype.itemsize
                           + t2.size * t2.dtype.itemsize
                           + num_splits * _SUBLANES * _LANES * 4))

    partial = pl.pallas_call(
        kernel,
        out_shape=jax.ShapeDtypeStruct((num_splits * _SUBLANES, _LANES), jnp.float32),
        grid_spec=pltpu.PrefetchScalarGridSpec(
            num_scalar_prefetch=0,
            grid=(num_splits, tiles_per_split),
            in_specs=[pl.BlockSpec((tr, _LANES), in_map),
                      pl.BlockSpec((tr, _LANES), in_map)],
            out_specs=pl.BlockSpec((_SUBLANES, _LANES), lambda c, i: (c, 0)),
        ),
        compiler_params=pltpu.CompilerParams(
            dimension_semantics=("parallel", "arbitrary")),
        cost_estimate=cost,
    )(x2, t2)

    # Tiny final reduce + mean over the true element count.
    return jnp.sum(partial) / n


def _reference(inputs, targets, alpha=0.25, gamma=2):
    x = jnp.asarray(inputs, jnp.float32).reshape(-1)
    t = jnp.asarray(targets, jnp.float32).reshape(-1)
    bce = jnp.maximum(x, 0.0) - x * t + jnp.log1p(jnp.exp(-jnp.abs(x)))
    at = jnp.where(t > 0.5, 1.0 - alpha, alpha)
    pt = jnp.exp(-bce)
    return jnp.mean(at * (1.0 - pt) ** gamma * bce)


if __name__ == "__main__":
    key = jax.random.PRNGKey(0)
    k1, k2, k3, k4, k5, k6 = jax.random.split(key, 6)

    # Test 1: f32 logits and {0,1} f32 targets (module's intended use).
    N1 = 2048
    x1 = jax.random.normal(k1, (N1,), dtype=jnp.float32) * 2.0
    t1 = (jax.random.uniform(k2, (N1,)) > 0.7).astype(jnp.float32)
    loss1 = jax.block_until_ready(weighted_focal_loss(x1, t1, alpha=0.25, gamma=2))
    ref1 = _reference(x1, t1, alpha=0.25, gamma=2)
    assert jnp.allclose(loss1, ref1, rtol=1e-5, atol=1e-6), (loss1, ref1)

    # Test 2: bf16 logits/targets streamed in native dtype, odd size
    # (exercises padding + gated in-kernel mask path).
    N2 = 1000
    x2 = (jax.random.normal(k3, (N2,), dtype=jnp.float32) * 2.0).astype(jnp.bfloat16)
    t2 = (jax.random.uniform(k4, (N2,)) > 0.5).astype(jnp.bfloat16)
    loss2 = jax.block_until_ready(weighted_focal_loss(x2, t2, alpha=0.25, gamma=2))
    ref2 = _reference(x2, t2, alpha=0.25, gamma=2)
    assert jnp.allclose(loss2, ref2, rtol=1e-5, atol=1e-6), (loss2, ref2)

    # Test 3: 3-D input, small tiles forced so grid = (2 splits, 2 tiles)
    # exercises multi-step accumulation into the resident output block.
    shape3 = (2, 16, 128)
    x3 = jax.random.normal(k5, shape3, dtype=jnp.float32)
    t3 = (jax.random.uniform(k6, shape3) > 0.4).astype(jnp.float32)
    loss3 = jax.block_until_ready(
        weighted_focal_loss(x3, t3, alpha=0.25, gamma=2,
                            rows_per_block=8, num_splits=2))
    ref3 = _reference(x3, t3, alpha=0.25, gamma=2)
    assert jnp.allclose(loss3, ref3, rtol=1e-5, atol=1e-6), (loss3, ref3)

    print("KERNEL_OK")
</pallas_src>

<mosaic_0001>
module attributes {stable_mosaic.version = 11 : i64} {
  func.func @_focal_loss_kernel(%arg0: i32, %arg1: i32, %arg2: memref<16x128xf32, #tpu.memory_space<vmem>>, %arg3: memref<16x128xf32, #tpu.memory_space<vmem>>, %arg4: memref<8x128xf32, #tpu.memory_space<vmem>>) attributes {dimension_semantics = [#tpu.dimension_semantics<parallel>, #tpu.dimension_semantics<arbitrary>], iteration_bounds = array<i64: 2, 1>, scalar_prefetch = 0 : i64, scratch_operands = 0 : i64, tpu.core_type = #tpu.core_type<tc>, window_params = [{transform_indices = @transform_0, window_bounds = array<i64: 16, 128>}, {transform_indices = @transform_1, window_bounds = array<i64: 16, 128>}, {transform_indices = @transform_2, window_bounds = array<i64: 8, 128>}]} {
    %c0_i32 = arith.constant 0 : i32
    %0 = arith.cmpi eq, %arg1, %c0_i32 : i32
    %1 = arith.extui %0 : i1 to i32
    %c0_i32_0 = arith.constant 0 : i32
    %2 = arith.cmpi ne, %1, %c0_i32_0 : i32
    scf.if %2 {
      %cst_19 = arith.constant 0.000000e+00 : f32
      %48 = vector.broadcast %cst_19 : f32 to vector<8x128xf32>
      %c0_20 = arith.constant 0 : index
      %c0_21 = arith.constant 0 : index
      %49 = vector.load %arg4[%c0_20, %c0_21] : memref<8x128xf32, #tpu.memory_space<vmem>>, vector<8x128xf32>
      tpu.vector_store %arg4[%c0_20, %c0_21], %48 {strides = array<i32>} : memref<8x128xf32, #tpu.memory_space<vmem>>, vector<8x128xf32>,
    } else {
    }
    %c0 = arith.constant 0 : index
    %c0_1 = arith.constant 0 : index
    %3 = vector.load %arg2[%c0, %c0_1] : memref<16x128xf32, #tpu.memory_space<vmem>>, vector<16x128xf32>
    %c0_2 = arith.constant 0 : index
    %c0_3 = arith.constant 0 : index
    %4 = vector.load %arg3[%c0_2, %c0_3] : memref<16x128xf32, #tpu.memory_space<vmem>>, vector<16x128xf32>
    %5 = math.absf %3 : vector<16x128xf32>
    %cst = arith.constant 0.000000e+00 : f32
    %6 = vector.broadcast %cst : f32 to vector<16x128xf32>
    %7 = arith.subf %6, %5 : vector<16x128xf32>
    %8 = math.exp %7 : vector<16x128xf32>
    %cst_4 = arith.constant 0.000000e+00 : f32
    %9 = vector.broadcast %cst_4 : f32 to vector<16x128xf32>
    %10 = arith.maximumf %3, %9 : vector<16x128xf32>
    %11 = arith.mulf %3, %4 : vector<16x128xf32>
    %12 = arith.subf %10, %11 : vector<16x128xf32>
    %13 = math.log1p %8 : vector<16x128xf32>
    %14 = arith.addf %12, %13 : vector<16x128xf32>
    %cst_5 = arith.constant 1.000000e+00 : f32
    %15 = vector.broadcast %cst_5 : f32 to vector<16x128xf32>
    %16 = arith.addf %15, %8 : vector<16x128xf32>
    %cst_6 = arith.constant 1.000000e+00 : f32
    %17 = vector.broadcast %cst_6 : f32 to vector<16x128xf32>
    %18 = arith.divf %17, %16 : vector<16x128xf32>
    %cst_7 = arith.constant 0.000000e+00 : f32
    %19 = vector.broadcast %cst_7 : f32 to vector<16x128xf32>
    %20 = arith.cmpf oge, %3, %19 : vector<16x128xf32>
    %21 = arith.mulf %8, %18 : vector<16x128xf32>
    %22 = arith.select %20, %18, %21 : vector<16x128xi1>, vector<16x128xf32>
    %cst_8 = arith.constant 5.000000e-01 : f32
    %23 = vector.broadcast %cst_8 : f32 to vector<16x128xf32>
    %24 = arith.cmpf ogt, %4, %23 : vector<16x128xf32>
    %cst_9 = arith.constant 1.000000e+00 : f32
    %25 = vector.broadcast %cst_9 : f32 to vector<16x128xf32>
    %26 = arith.subf %25, %22 : vector<16x128xf32>
    %27 = arith.select %24, %22, %26 : vector<16x128xi1>, vector<16x128xf32>
    %cst_10 = arith.constant 5.000000e-01 : f32
    %28 = vector.broadcast %cst_10 : f32 to vector<16x128xf32>
    %29 = arith.cmpf ogt, %4, %28 : vector<16x128xf32>
    %cst_11 = arith.constant 7.500000e-01 : f32
    %cst_12 = arith.constant 2.500000e-01 : f32
    %30 = vector.broadcast %cst_11 : f32 to vector<16x128xf32>
    %31 = vector.broadcast %cst_12 : f32 to vector<16x128xf32>
    %32 = arith.select %29, %30, %31 : vector<16x128xi1>, vector<16x128xf32>
    %cst_13 = arith.constant 1.000000e+00 : f32
    %33 = vector.broadcast %cst_13 : f32 to vector<16x128xf32>
    %34 = arith.subf %33, %27 : vector<16x128xf32>
    %cst_14 = arith.constant 0.000000e+00 : f32
    %35 = vector.broadcast %cst_14 : f32 to vector<16x128xf32>
    %36 = arith.maximumf %34, %35 : vector<16x128xf32>
    %37 = arith.mulf %36, %36 : vector<16x128xf32>
    %38 = arith.mulf %32, %37 : vector<16x128xf32>
    %39 = arith.mulf %38, %14 : vector<16x128xf32>
    %c1_i32 = arith.constant 1 : i32
    %40 = arith.muli %arg0, %c1_i32 : i32
    %41 = arith.addi %40, %arg1 : i32
    %c1_i32_15 = arith.constant 1 : i32
    %42 = arith.cmpi slt, %41, %c1_i32_15 : i32
    %43 = arith.extui %42 : i1 to i32
    %c0_i32_16 = arith.constant 0 : i32
    %44 = arith.cmpi ne, %43, %c0_i32_16 : i32
    scf.if %44 {
      %c0_19 = arith.constant 0 : index
      %c0_20 = arith.constant 0 : index
      %48 = vector.load %arg4[%c0_19, %c0_20] : memref<8x128xf32, #tpu.memory_space<vmem>>, vector<8x128xf32>
      %49 = vector.shape_cast %39 : vector<16x128xf32> to vector<2x8x128xf32>
      %cst_21 = arith.constant dense<0.000000e+00> : vector<8x128xf32>
      %50 = vector.multi_reduction <add>, %49, %cst_21 [0] : vector<2x8x128xf32> to vector<8x128xf32>
      %51 = arith.addf %48, %50 : vector<8x128xf32>
      %c0_22 = arith.constant 0 : index
      %c0_23 = arith.constant 0 : index
      %52 = vector.load %arg4[%c0_22, %c0_23] : memref<8x128xf32, #tpu.memory_space<vmem>>, vector<8x128xf32>
      tpu.vector_store %arg4[%c0_22, %c0_23], %51 {strides = array<i32>} : memref<8x128xf32, #tpu.memory_space<vmem>>, vector<8x128xf32>,
    } else {
    }
    %c1_i32_17 = arith.constant 1 : i32
    %45 = arith.cmpi sge, %41, %c1_i32_17 : i32
    %46 = arith.extui %45 : i1 to i32
    %c0_i32_18 = arith.constant 0 : i32
    %47 = arith.cmpi ne, %46, %c0_i32_18 : i32
    scf.if %47 {
      %48 = tpu.iota {dimensions = array<i32: 0>} : vector<16x128xi32>
      %c16_i32 = arith.constant 16 : i32
      %49 = arith.muli %41, %c16_i32 : i32
      %50 = vector.broadcast %49 : i32 to vector<16x128xi32>
      %51 = arith.addi %48, %50 : vector<16x128xi32>
      %52 = tpu.iota {dimensions = array<i32: 1>} : vector<16x128xi32>
      %c128_i32 = arith.constant 128 : i32
      %53 = vector.broadcast %c128_i32 : i32 to vector<16x128xi32>
      %54 = arith.muli %51, %53 : vector<16x128xi32>
      %55 = arith.addi %54, %52 : vector<16x128xi32>
      %c2048_i32 = arith.constant 2048 : i32
      %56 = vector.broadcast %c2048_i32 : i32 to vector<16x128xi32>
      %57 = arith.cmpi slt, %55, %56 : vector<16x128xi32>
      %cst_19 = arith.constant 0.000000e+00 : f32
      %58 = vector.broadcast %cst_19 : f32 to vector<16x128xf32>
      %59 = arith.select %57, %39, %58 : vector<16x128xi1>, vector<16x128xf32>
      %c0_20 = arith.constant 0 : index
      %c0_21 = arith.constant 0 : index
      %60 = vector.load %arg4[%c0_20, %c0_21] : memref<8x128xf32, #tpu.memory_space<vmem>>, vector<8x128xf32>
      %61 = vector.shape_cast %59 : vector<16x128xf32> to vector<2x8x128xf32>
      %cst_22 = arith.constant dense<0.000000e+00> : vector<8x128xf32>
      %62 = vector.multi_reduction <add>, %61, %cst_22 [0] : vector<2x8x128xf32> to vector<8x128xf32>
      %63 = arith.addf %60, %62 : vector<8x128xf32>
      %c0_23 = arith.constant 0 : index
      %c0_24 = arith.constant 0 : index
      %64 = vector.load %arg4[%c0_23, %c0_24] : memref<8x128xf32, #tpu.memory_space<vmem>>, vector<8x128xf32>
      tpu.vector_store %arg4[%c0_23, %c0_24], %63 {strides = array<i32>} : memref<8x128xf32, #tpu.memory_space<vmem>>, vector<8x128xf32>,
    } else {
    }
    return
  }
  func.func @transform_0(%arg0: i32, %arg1: i32) -> (i32, i32) {
    %c1_i32 = arith.constant 1 : i32
    %0 = arith.muli %arg0, %c1_i32 : i32
    %1 = arith.addi %0, %arg1 : i32
    %c0_i32 = arith.constant 0 : i32
    %c0_i32_0 = arith.constant 0 : i32
    return %1, %c0_i32 : i32, i32
  }
  func.func @transform_1(%arg0: i32, %arg1: i32) -> (i32, i32) {
    %c1_i32 = arith.constant 1 : i32
    %0 = arith.muli %arg0, %c1_i32 : i32
    %1 = arith.addi %0, %arg1 : i32
    %c0_i32 = arith.constant 0 : i32
    %c0_i32_0 = arith.constant 0 : i32
    return %1, %c0_i32 : i32, i32
  }
  func.func @transform_2(%arg0: i32, %arg1: i32) -> (i32, i32) {
    %c0_i32 = arith.constant 0 : i32
    %c0_i32_0 = arith.constant 0 : i32
    return %arg0, %c0_i32 : i32, i32
  }
}

</mosaic_0001>

<llo_original>
// kernel: tpu_custom_call.1
$region0: #{tpu_custom_call.1}
  #allocation0 [shape = 'u32[]', space=smem, size = 0x4, offset = 0x4, fixed_abs, tag = 'smem constant byte address 0x4 - core index']
  #allocation1 [shape = 'u32[144,128]{1,0:T(1,128)}', space=vmem, size = 0x12000, scoped, tag = 'internal scratch']
  %s0 = inlined_call_operand.hbm [shape: f32[32,128], index: 0, kind: input, shape index: {}]
  %s1 = inlined_call_operand.hbm [shape: f32[32,128], index: 1, kind: input, shape index: {}]
  %s2 = inlined_call_operand.hbm [shape: f32[16,128], index: 2, kind: output, shape index: {}]
  %s3 = sld [smem:[#allocation0]]
  $region61: #{tpu_custom_call.1} parent=0
    _
  %s5 = ssub.s32 1, %s3
  %s6 = scalar_select 0, %s5, %s3
  $region1: #{tpu_custom_call.1} parent=0
    #allocation2 [shape = 'u8[16384]{0}', space=vmem, size = 0x4000, scoped, tag = 'input window, operand 0']
    #allocation3 [shape = 's32[2]{0}', space=sflag, size = 0x8, scoped, tag = 'scoped memory for tpu_custom_call.1']
    #allocation4 [shape = 's32[2]{0}', space=sflag, size = 0x8, scoped, tag = 'scoped memory for tpu_custom_call.1']
    #allocation5 [shape = 'u8[16384]{0}', space=vmem, size = 0x4000, scoped, tag = 'input window, operand 1']
    #allocation6 [shape = 's32[2]{0}', space=sflag, size = 0x8, scoped, tag = 'scoped memory for tpu_custom_call.1']
    #allocation7 [shape = 'u8[8192]{0}', space=vmem, size = 0x2000, scoped, tag = 'output window, operand 0']
    %7 = vsyncpa [#allocation3], 0
    %s8 = scalar_lea.sflag [#allocation3], 1
    %9 = vsyncpa %s8, 0
    %10 = vsyncpa [#allocation6], 0
    %s11 = scalar_lea.sflag [#allocation6], 1
    %12 = vsyncpa %s11, 0
    %13 = vsyncpa [#allocation4], 0
    %s14 = scalar_lea.sflag [#allocation4], 1
    %15 = vsyncpa %s14, 0
    loop: start=0, step=1, limit=4
    $region2: #{tpu_custom_call.1} parent=1 // loop_pre_header
      _
    $region3: #{tpu_custom_call.1} parent=1 // loop_header
      %s17 = sphi 0, %s21
      %p18 = scmp.ge.s32.totalorder %s17, 4
      %s24 = sphi 0, %s36
      %s25 = sphi 0, %s32
      %s26 = sphi 0, %s24
      %s27 = sphi 0, %s25
      %s28 = sphi 0, %s26
      %s29 = sphi 0, %s27
      %s41 = sphi 0, %s43
      %s44 = sphi 0, %s41
      %s45 = sphi 0, %s44
      %s61 = sphi 0, %s45
      %s69 = sphi 0, %s71
      %s72 = sphi 0, %s69
      %s73 = sphi 0, %s72
      %s89 = sphi 0, %s73
      %s95 = sphi 0, %s97
      %s98 = sphi 0, %s95
      %s99 = sphi 0, %s98
      %s115 = sphi 0, %s99
    $region4: #{tpu_custom_call.1} parent=1 // loop_header_branch
      %20 = sbr.rel (%p18) target = $region8
    $region5: #{tpu_custom_call.1} parent=1 // loop_body
      %s22 = ssub.s32 %s17, 1
      %s23 = ssub.s32 %s17, 2
      %s30 = sadd.s32 1, %s25
      %p31 = scmp.ge.s32.totalorder %s30, 1
      %s32 = scalar_select %p31, 0, %s30
      %s33 = sadd.s32 1, %s24
      %s34 = scalar_select %p31, %s33, %s24
      %p35 = scmp.ge.s32.totalorder %s34, 2
      %s36 = scalar_select %p35, 0, %s34
      %s37 = sadd.s32 %s24, %s25
      %s38 = sadd.s32 %s36, %s32
      %s39 = ssub.s32 %s37, %s38
      %p40 = scmp.eq.s32.totalorder %s39, 0
      %s42 = sadd.s32 %s41, 1
      %s43 = scalar_select %p40, %s41, %s42
      %p46 = pneg %p40
      %p47 = scmp.eq.s32.totalorder %s17, 1
      %p48 = por %p46, %p47
      %p49 = scmp.ne.s32.totalorder %s41, %s44
      %p50 = scmp.eq.s32.totalorder %s17, 0
      %p51 = por %p49, %p50
      %p52 = scmp.ne.s32.totalorder %s41, %s44
      %p53 = scmp.eq.s32.totalorder %s22, 1
      %p54 = por %p52, %p53
      %p55 = scmp.ne.s32.totalorder %s44, %s45
      %p56 = scmp.eq.s32.totalorder %s22, 0
      %p57 = por %p55, %p56
      %p58 = scmp.ne.s32.totalorder %s44, %s45
      %p59 = scmp.eq.s32.totalorder %s23, 1
      %p60 = por %p58, %p59
      %p62 = scmp.ne.s32.totalorder %s45, %s61
      %p63 = scmp.eq.s32.totalorder %s23, 0
      %p64 = por %p62, %p63
      %s65 = sadd.s32 %s24, %s25
      %s66 = sadd.s32 %s36, %s32
      %s67 = ssub.s32 %s65, %s66
      %p68 = scmp.eq.s32.totalorder %s67, 0
      %s70 = sadd.s32 %s69, 1
      %s71 = scalar_select %p68, %s69, %s70
      %p74 = pneg %p68
      %p75 = scmp.eq.s32.totalorder %s17, 1
      %p76 = por %p74, %p75
      %p77 = scmp.ne.s32.totalorder %s69, %s72
      %p78 = scmp.eq.s32.totalorder %s17, 0
      %p79 = por %p77, %p78
      %p80 = scmp.ne.s32.totalorder %s69, %s72
      %p81 = scmp.eq.s32.totalorder %s22, 1
      %p82 = por %p80, %p81
      %p83 = scmp.ne.s32.totalorder %s72, %s73
      %p84 = scmp.eq.s32.totalorder %s22, 0
      %p85 = por %p83, %p84
      %p86 = scmp.ne.s32.totalorder %s72, %s73
      %p87 = scmp.eq.s32.totalorder %s23, 1
      %p88 = por %p86, %p87
      %p90 = scmp.ne.s32.totalorder %s73, %s89
      %p91 = scmp.eq.s32.totalorder %s23, 0
      %p92 = por %p90, %p91
      %s93 = ssub.s32 %s24, %s36
      %p94 = scmp.eq.s32.totalorder %s93, 0
      %s96 = sadd.s32 %s95, 1
      %s97 = scalar_select %p94, %s95, %s96
      %p100 = pneg %p94
      %p101 = scmp.eq.s32.totalorder %s17, 1
      %p102 = por %p100, %p101
      %p103 = scmp.ne.s32.totalorder %s95, %s98
      %p104 = scmp.eq.s32.totalorder %s17, 0
      %p105 = por %p103, %p104
      %p106 = scmp.ne.s32.totalorder %s95, %s98
      %p107 = scmp.eq.s32.totalorder %s22, 1
      %p108 = por %p106, %p107
      %p109 = scmp.ne.s32.totalorder %s98, %s99
      %p110 = scmp.eq.s32.totalorder %s22, 0
      %p111 = por %p109, %p110
      %p112 = scmp.ne.s32.totalorder %s98, %s99
      %p113 = scmp.eq.s32.totalorder %s23, 1
      %p114 = por %p112, %p113
      %p116 = scmp.ne.s32.totalorder %s99, %s115
      %p117 = scmp.eq.s32.totalorder %s23, 0
      %p118 = por %p116, %p117
      %p119 = scmp.le.s32.totalorder 1, %s17
      %p120 = scmp.lt.s32.totalorder %s17, 3
      %p121 = pnand %p119, %p120
      %p122 = pneg %p121
      // Predicated region
      $region9: #{tpu_custom_call.1} parent=5 // pred_check
        _
      $region10: #{tpu_custom_call.1} parent=5 // pred_check_branch
        %124 = sbr.rel (%p121) target = $region12
      $region11: #{tpu_custom_call.1} parent=5 // pred_region
        %s125 = ssub.s32 %s17, 1
      $region12: #{tpu_custom_call.1} parent=5 // pred_fallthru
        _
      %p126 = scmp.lt.s32.totalorder %s17, 2
      // Predicated region
      $region13: #{tpu_custom_call.1} parent=5 // pred_check
        %p127 = pneg %p126
      $region14: #{tpu_custom_call.1} parent=5 // pred_check_branch
        %129 = sbr.rel (%p127) target = $region16
      $region15: #{tpu_custom_call.1} parent=5 // pred_region
        // Predicated region
        $region17: #{tpu_custom_call.1} parent=15 // pred_check
          %p130 = pneg %p51
        $region18: #{tpu_custom_call.1} parent=15 // pred_check_branch
          %132 = sbr.rel (%p130) target = $region20
        $region19: #{tpu_custom_call.1} parent=15 // pred_region
          %s133 = sand.u32 %s41, 1
          %s134 = scalar_lea.sflag [#allocation3], %s133
          %s135 = sand.u32 %s41, 1
          %s136 = smul.addr %s135, 16
          %s137 = scalar_lea.vmem [#allocation2], %s136
          %s138 = sadd.s32 %s24, %s25
          %s139 = smul.u32 2, %s138
          %s141 = ssub.s32 256, 256
          %142 = vsyncadd %s134, %s141
          %s143 = smul.addr %s139, 128
          %s144 = scalar_lea.hbm %s0, %s143
          %s145 = sshll.u32 %s137, 4
          %s146 = int_to_ptr.vmem [resolvable:$true] %s145
          %151 = dma.hbm_to_vmem [thread:$0]  %s144, 256, %s146, %s134, 128, 128, 8
        $region20: #{tpu_custom_call.1} parent=15 // pred_fallthru
          _
        // Predicated region
        $region21: #{tpu_custom_call.1} parent=15 // pred_check
          %p152 = pneg %p79
        $region22: #{tpu_custom_call.1} parent=15 // pred_check_branch
          %154 = sbr.rel (%p152) target = $region24
        $region23: #{tpu_custom_call.1} parent=15 // pred_region
          %s155 = sand.u32 %s69, 1
          %s156 = scalar_lea.sflag [#allocation6], %s155
          %s157 = sand.u32 %s69, 1
          %s158 = smul.addr %s157, 16
          %s159 = scalar_lea.vmem [#allocation5], %s158
          %s160 = sadd.s32 %s24, %s25
          %s161 = smul.u32 2, %s160
          %s163 = ssub.s32 256, 256
          %164 = vsyncadd %s156, %s163
          %s165 = smul.addr %s161, 128
          %s166 = scalar_lea.hbm %s1, %s165
          %s167 = sshll.u32 %s159, 4
          %s168 = int_to_ptr.vmem [resolvable:$true] %s167
          %173 = dma.hbm_to_vmem [thread:$0]  %s166, 256, %s168, %s156, 128, 128, 8
        $region24: #{tpu_custom_call.1} parent=15 // pred_fallthru
          _
      $region16: #{tpu_custom_call.1} parent=5 // pred_fallthru
        _
      %p174 = scmp.le.s32.totalorder 1, %s17
      %p175 = scmp.lt.s32.totalorder %s17, 3
      %p176 = pnand %p174, %p175
      %p177 = pneg %p176
      // Predicated region
      $region25: #{tpu_custom_call.1} parent=5 // pred_check
        _
      $region26: #{tpu_custom_call.1} parent=5 // pred_check_branch
        %179 = sbr.rel (%p176) target = $region28
      $region27: #{tpu_custom_call.1} parent=5 // pred_region
        %s180 = ssub.s32 %s17, 1
        %s181 = sand.u32 %s44, 1
        %s182 = scalar_lea.sflag [#allocation3], %s181
        %s183 = sand.u32 %s44, 1
        %s184 = smul.addr %s183, 16
        %s185 = scalar_lea.vmem [#allocation2], %s184
        // Predicated region
        $region29: #{tpu_custom_call.1} parent=27 // pred_check
          %p186 = pneg %p57
        $region30: #{tpu_custom_call.1} parent=27 // pred_check_branch
          %188 = sbr.rel (%p186) target = $region32
        $region31: #{tpu_custom_call.1} parent=27 // pred_region
          %189 = dma.done %s182, 256
        $region32: #{tpu_custom_call.1} parent=27 // pred_fallthru
          _
        %s190 = sand.u32 %s72, 1
        %s191 = scalar_lea.sflag [#allocation6], %s190
        %s192 = sand.u32 %s72, 1
        %s193 = smul.addr %s192, 16
        %s194 = scalar_lea.vmem [#allocation5], %s193
        // Predicated region
        $region33: #{tpu_custom_call.1} parent=27 // pred_check
          %p195 = pneg %p85
        $region34: #{tpu_custom_call.1} parent=27 // pred_check_branch
          %197 = sbr.rel (%p195) target = $region36
        $region35: #{tpu_custom_call.1} parent=27 // pred_region
          %198 = dma.done %s191, 256
        $region36: #{tpu_custom_call.1} parent=27 // pred_fallthru
          _
        %s199 = sand.u32 %s44, 1
        %s200 = scalar_lea.sflag [#allocation3], %s199
        %s201 = sand.u32 %s44, 1
        %s202 = smul.addr %s201, 16
        %s203 = scalar_lea.vmem [#allocation2], %s202
        %p204 = pneg %p57
        %p205 = pneg %p54
        %s206 = sand.u32 %s72, 1
        %s207 = scalar_lea.sflag [#allocation6], %s206
        %s208 = sand.u32 %s72, 1
        %s209 = smul.addr %s208, 16
        %s210 = scalar_lea.vmem [#allocation5], %s209
        %p211 = pneg %p85
        %p212 = pneg %p82
        %p213 = pneg %p111
        %p214 = pneg %p108
        %s215 = sand.u32 %s98, 1
        %s216 = scalar_lea.sflag [#allocation4], %s215
        %s217 = sand.u32 %s98, 1
        %s218 = smul.addr %s217, 8
        %s219 = scalar_lea.vmem [#allocation7], %s218
        %s220 = sadd.s32 %s26, %s27
        %s221 = smul.u32 2, %s220
        %s222 = sadd.s32 %s26, %s27
        %s223 = smul.u32 2, %s222
        %p224 = scmp.eq.s32.totalorder %s27, 0
        // Predicated region
        $region37: #{tpu_custom_call.1} parent=27 // pred_check
          %p225 = pneg %p224
        $region38: #{tpu_custom_call.1} parent=27 // pred_check_branch
          %227 = sbr.rel (%p225) target = $region40
        $region39: #{tpu_custom_call.1} parent=27 // pred_region
          %228 = vst [vmem:[%s219] sm:$0xff] 0.0
        $region40: #{tpu_custom_call.1} parent=27 // pred_fallthru
          _
        %v229 = vld [vmem:[%s185] sm:$0xff]
        %v230 = vld [vmem:[%s185 + $0x8] sm:$0xff]
        %v231 = vld [vmem:[%s194] sm:$0xff]
        %v232 = vld [vmem:[%s194 + $0x8] sm:$0xff]
        %v233 = vand.u32 2147483647, %v229
        %v234 = vand.u32 2147483647, %v230
        %v235 = vsub.f32 0.0, %v233
        %v236 = vsub.f32 0.0, %v234
        %v237 = vmul.f32 %v235, 1.442695
        %v238 = vpow.pop %v237
        %v239 = vmul.f32 %v236, 1.442695
        %v240 = vpow.pop %v239
        %v241 = vmax.f32 %v229, 0.0
        %v242 = vmax.f32 %v230, 0.0
        %v243 = vmul.f32 %v229, %v231
        %v244 = vmul.f32 %v230, %v232
        %v245 = vsub.f32 %v241, %v243
        %v246 = vsub.f32 %v242, %v244
        %v247 = vadd.f32 %v238, 1.0
        %v248 = vlog2.pop %v247
        %v249 = vmul.f32 %v248, 0.6931472
        %v250 = vmul.f32 -0.5, %v238
        %v251 = vadd.f32 %v250, 1.0
        %v252 = vmul.f32 %v251, %v238
        %v253 = vand.u32 2147483647, %v238
        %vm254 = vcmp.lt.f32.partialorder %v253, 0.0004427343
        %v255 = vsel %vm254, %v252, %v249
        %v256 = vadd.f32 %v240, 1.0
        %v257 = vlog2.pop %v256
        %v258 = vmul.f32 %v257, 0.6931472
        %v259 = vmul.f32 -0.5, %v240
        %v260 = vadd.f32 %v259, 1.0
        %v261 = vmul.f32 %v260, %v240
        %v262 = vand.u32 2147483647, %v240
        %vm263 = vcmp.lt.f32.partialorder %v262, 0.0004427343
        %v264 = vsel %vm263, %v261, %v258
        %v265 = vadd.f32 %v245, %v255
        %v266 = vadd.f32 %v246, %v264
        %v267 = vadd.f32 %v238, 1.0
        %v268 = vadd.f32 %v240, 1.0
        %v269 = vrcp.pop %v267
        %v270 = vmul.f32 1.0, %v269
        %v271 = vrcp.pop %v268
        %v272 = vmul.f32 1.0, %v271
        %vm273 = vcmp.ge.f32.partialorder %v229, 0.0
        %vm274 = vcmp.ge.f32.partialorder %v230, 0.0
        %v275 = vmul.f32 %v238, %v270
        %v276 = vmul.f32 %v240, %v272
        %v277 = vsel %vm273, %v270, %v275
        %v278 = vsel %vm274, %v272, %v276
        %vm279 = vcmp.gt.f32.partialorder %v231, 0.5
        %vm280 = vcmp.gt.f32.partialorder %v232, 0.5
        %v281 = vsub.f32 1.0, %v277
        %v282 = vsub.f32 1.0, %v278
        %v283 = vsel %vm279, %v277, %v281
        %v284 = vsel %vm280, %v278, %v282
        %v285 = vsel %vm279, 0.75, 0.25
        %v286 = vsel %vm280, 0.75, 0.25
        %v287 = vsub.f32 1.0, %v283
        %v288 = vsub.f32 1.0, %v284
        %v289 = vmax.f32 %v287, 0.0
        %v290 = vmax.f32 %v288, 0.0
        %v291 = vmul.f32 %v289, %v289
        %v292 = vmul.f32 %v290, %v290
        %v293 = vmul.f32 %v285, %v291
        %v294 = vmul.f32 %v286, %v292
        %v295 = vmul.f32 %v293, %v265
        %v296 = vmul.f32 %v294, %v266
        %s297 = sadd.s32 %s26, %s27
        %p298 = scmp.lt.s32.totalorder %s297, 1
        // Predicated region
        $region41: #{tpu_custom_call.1} parent=27 // pred_check
          %p299 = pneg %p298
        $region42: #{tpu_custom_call.1} parent=27 // pred_check_branch
          %301 = sbr.rel (%p299) target = $region44
        $region43: #{tpu_custom_call.1} parent=27 // pred_region
          %v302 = vld [vmem:[%s219] sm:$0xff]
          %v303 = vadd.f32 %v295, %v296
          %v304 = vadd.f32 %v302, %v303
          %305 = vst [vmem:[%s219] sm:$0xff] %v304
        $region44: #{tpu_custom_call.1} parent=27 // pred_fallthru
          _
        %p306 = scmp.ge.s32.totalorder %s297, 1
        // Predicated region
        $region45: #{tpu_custom_call.1} parent=27 // pred_check
          %p307 = pneg %p306
        $region46: #{tpu_custom_call.1} parent=27 // pred_check_branch
          %309 = sbr.rel (%p307) target = $region48
        $region47: #{tpu_custom_call.1} parent=27 // pred_region
          %v310 = vlaneseq
          %v311 = vshrl.u32 %v310, 7
          %v312 = vadd.s32 %v311, 8
          %s313 = smul.u32 %s297, 16
          %v314 = vstv %s313
          %v315 = vadd.s32 %v311, %v314
          %v316 = vadd.s32 %v312, %v314
          %v317 = vlaneseq
          %v318 = vand.u32 %v317, 127
          %v319 = vmul.u32 %v315, 128
          %v320 = vmul.u32 %v316, 128
          %v321 = vadd.s32 %v319, %v318
          %v322 = vadd.s32 %v320, %v318
          %vm323 = vcmp.lt.s32.totalorder %v321, 2048
          %vm324 = vcmp.lt.s32.totalorder %v322, 2048
          %v325 = vsel %vm323, %v295, 0.0
          %v326 = vsel %vm324, %v296, 0.0
          %v327 = vld [vmem:[%s219] sm:$0xff]
          %v328 = vadd.f32 %v325, %v326
          %v329 = vadd.f32 %v327, %v328
          %330 = vst [vmem:[%s219] sm:$0xff] %v329
        $region48: #{tpu_custom_call.1} parent=27 // pred_fallthru
          _
        %s331 = sand.u32 %s98, 1
        %s332 = scalar_lea.sflag [#allocation4], %s331
        %s333 = sand.u32 %s98, 1
        %s334 = smul.addr %s333, 8
        %s335 = scalar_lea.vmem [#allocation7], %s334
        // Predicated region
        $region49: #{tpu_custom_call.1} parent=27 // pred_check
          %p336 = pneg %p108
        $region50: #{tpu_custom_call.1} parent=27 // pred_check_branch
          %338 = sbr.rel (%p336) target = $region52
        $region51: #{tpu_custom_call.1} parent=27 // pred_region
          %s340 = ssub.s32 128, 128
          %341 = vsyncadd %s332, %s340
          %s342 = smul.addr %s26, 128
          %s343 = scalar_lea.hbm %s2, %s342
          %s345 = sshll.u32 %s335, 4
          %s346 = int_to_ptr.vmem [resolvable:$true] %s345
          %348 = dma.vmem_to_hbm [thread:$0]  %s346, 128, %s343, %s332
        $region52: #{tpu_custom_call.1} parent=27 // pred_fallthru
          _
      $region28: #{tpu_custom_call.1} parent=5 // pred_fallthru
        _
      %p349 = scmp.le.s32.totalorder 2, %s17
      // Predicated region
      $region53: #{tpu_custom_call.1} parent=5 // pred_check
        %p350 = pneg %p349
      $region54: #{tpu_custom_call.1} parent=5 // pred_check_branch
        %352 = sbr.rel (%p350) target = $region56
      $region55: #{tpu_custom_call.1} parent=5 // pred_region
        %s353 = ssub.s32 %s17, 2
        // Predicated region
        $region57: #{tpu_custom_call.1} parent=55 // pred_check
          %p354 = pneg %p114
        $region58: #{tpu_custom_call.1} parent=55 // pred_check_branch
          %356 = sbr.rel (%p354) target = $region60
        $region59: #{tpu_custom_call.1} parent=55 // pred_region
          %s357 = sand.u32 %s99, 1
          %s358 = scalar_lea.sflag [#allocation4], %s357
          %s359 = sand.u32 %s99, 1
          %s360 = smul.addr %s359, 8
          %s361 = scalar_lea.vmem [#allocation7], %s360
          %362 = dma.done %s358, 128
        $region60: #{tpu_custom_call.1} parent=55 // pred_fallthru
          _
      $region56: #{tpu_custom_call.1} parent=5 // pred_fallthru
        _
    $region6: #{tpu_custom_call.1} parent=1 // loop_footer
      %s21 = sadd.s32 1, %s17
    $region7: #{tpu_custom_call.1} parent=1 // loop_footer_branch
      %16 = sbr.rel target = $region3
    $region8: #{tpu_custom_call.1} parent=1 // loop_exit
      _
    %363 = vsyncpa [#allocation3], 1
    %s364 = scalar_lea.sflag [#allocation3], 1
    %365 = vsyncpa %s364, 1
    %366 = vsyncpa [#allocation6], 1
    %s367 = scalar_lea.sflag [#allocation6], 1
    %368 = vsyncpa %s367, 1
    %369 = vsyncpa [#allocation4], 1
    %s370 = scalar_lea.sflag [#allocation4], 1
    %371 = vsyncpa %s370, 1

</llo_original>
